<compile_context>
chip_gen: v7x
topology: tpu7x:2x2x1
jax: 0.10.0
libtpu: 0.0.40
codegen_flags: <defaults>
</compile_context>

<pallas_src>
import jax
import jax.numpy as jnp
import numpy as np
from jax.experimental import pallas as pl
from jax.experimental.pallas import tpu as pltpu

KH = KW = 3  # fixed 3x3 conv of the stem


def _round_up(x, m):
    return (x + m - 1) // m * m


def _stem_kernel(p_ref, w_ref, b_ref, o_ref):
    """One M-tile per grid step.

    p_ref: (TILE_M, K_pad)  im2col patches (zero-padded along K)
    w_ref: (K_pad, C_pad)   conv weights with BN scale folded in (zero-padded)
    b_ref: (1, C_pad)       folded BN bias (zero-padded)
    o_ref: (TILE_M, C_pad)  output tile (lane-dense, unmasked stores)
    """
    acc = jnp.dot(p_ref[...], w_ref[...], preferred_element_type=jnp.float32)
    # BN bias + ReLU; Dropout(p=0) is the identity.
    o_ref[...] = jnp.maximum(acc + b_ref[...], 0.0).astype(o_ref.dtype)


def stem_forward(x_nchw, weight_oihw, gamma, beta, running_mean, running_var,
                 eps=1e-5):
    """Forward pass of _Stem. x_nchw: (N, Cin, H, W) f32 -> (N, Cout, H, W)."""
    N, Cin, H, W = x_nchw.shape
    Cout = weight_oihw.shape[0]
    K = KH * KW * Cin
    K_pad = _round_up(K, 128)      # 306 -> 384: lane-dense contraction axis
    C_pad = _round_up(Cout, 128)   # 32 -> 128: unmasked full-lane output

    # ---- fold BatchNorm2d (eval / running stats) into weights + bias ----
    scale = gamma / jnp.sqrt(running_var + eps)                    # (Cout,)
    bias = (beta - running_mean * scale).astype(jnp.float32)       # (Cout,)
    # OIHW -> HWIO, scale folded on the output-channel axis (exact).
    w_hwio = jnp.transpose(weight_oihw, (2, 3, 1, 0)).astype(jnp.float32) * scale
    w_mat = jnp.pad(w_hwio.reshape(K, Cout), ((0, K_pad - K), (0, C_pad - Cout)))
    bias_mat = jnp.pad(bias.reshape(1, Cout), ((0, 0), (0, C_pad - Cout)))

    # ---- im2col: NCHW -> NHWC, zero-pad spatial (conv padding=1), gather 3x3 taps ----
    x_nhwc = jnp.transpose(x_nchw, (0, 2, 3, 1)).astype(jnp.float32)
    x_p = jnp.pad(x_nhwc, ((0, 0), (1, 1), (1, 1), (0, 0)))
    cols = [x_p[:, dy:dy + H, dx:dx + W, :] for dy in range(KH) for dx in range(KW)]
    patches = jnp.concatenate(cols, axis=-1).reshape(N * H * W, K)

    M = N * H * W
    TILE_M = _round_up(M, 8) if M <= 512 else 256
    M_pad = _round_up(M, TILE_M)
    patches = jnp.pad(patches, ((0, M_pad - M), (0, K_pad - K)))
    num_tiles = M_pad // TILE_M

    out = pl.pallas_call(
        _stem_kernel,
        out_shape=jax.ShapeDtypeStruct((M_pad, C_pad), jnp.float32),
        grid_spec=pltpu.PrefetchScalarGridSpec(
            num_scalar_prefetch=0,
            grid=(num_tiles,),
            in_specs=[
                pl.BlockSpec((TILE_M, K_pad), lambda i: (i, 0)),
                pl.BlockSpec((K_pad, C_pad), lambda i: (0, 0)),
                pl.BlockSpec((1, C_pad), lambda i: (0, 0)),
            ],
            out_specs=pl.BlockSpec((TILE_M, C_pad), lambda i: (i, 0)),
        ),
        compiler_params=pltpu.CompilerParams(
            dimension_semantics=("parallel",)),
    )(patches, w_mat, bias_mat)

    # Drop M/Cout padding, back to PyTorch's NCHW convention.
    out = out[:M, :Cout].reshape(N, H, W, Cout)
    return jnp.transpose(out, (0, 3, 1, 2))


def _reference_forward(x_nchw, weight_oihw, gamma, beta, mean, var, eps=1e-5):
    """Pure-JAX reference (lax conv) for a correctness check."""
    y = jax.lax.conv_general_dilated(
        x_nchw, weight_oihw, window_strides=(1, 1), padding=((1, 1), (1, 1)),
        dimension_numbers=("NCHW", "OIHW", "NCHW"))
    scale = (gamma / jnp.sqrt(var + eps)).reshape(1, -1, 1, 1)
    bias = (beta - mean * gamma / jnp.sqrt(var + eps)).reshape(1, -1, 1, 1)
    return jnp.maximum(y * scale + bias, 0.0)


if __name__ == "__main__":
    # Small but module-consistent shapes: AlphaZero board stem.
    N, Cin, H, W = 2, 34, 8, 8      # nb_input_channels=34 (module default)
    Cout = 32                        # channels for the 1st conv

    key = jax.random.PRNGKey(0)
    kx, kw, kg, kb, km, kv = jax.random.split(key, 6)

    x = jax.random.normal(kx, (N, Cin, H, W), dtype=jnp.float32)
    weight = jax.random.normal(kw, (Cout, Cin, KH, KW), dtype=jnp.float32) * 0.05
    gamma = 1.0 + 0.1 * jax.random.normal(kg, (Cout,), dtype=jnp.float32)
    beta = 0.1 * jax.random.normal(kb, (Cout,), dtype=jnp.float32)
    running_mean = 0.1 * jax.random.normal(km, (Cout,), dtype=jnp.float32)
    running_var = jnp.abs(jax.random.normal(kv, (Cout,), dtype=jnp.float32)) + 0.5

    fwd = jax.jit(stem_forward)  # lets XLA fuse transpose/pad/im2col into one pass
    out = jax.block_until_ready(fwd(x, weight, gamma, beta, running_mean, running_var))

    ref = _reference_forward(x, weight, gamma, beta, running_mean, running_var)
    np.testing.assert_allclose(np.asarray(out), np.asarray(ref),
                               rtol=1e-4, atol=1e-4)

    print("KERNEL_OK")
</pallas_src>

<mosaic_0001>
module attributes {stable_mosaic.version = 11 : i64} {
  func.func @_stem_kernel(%arg0: i32, %arg1: memref<128x384xf32, #tpu.memory_space<vmem>>, %arg2: memref<384x128xf32, #tpu.memory_space<vmem>>, %arg3: memref<1x128xf32, #tpu.memory_space<vmem>>, %arg4: memref<128x128xf32, #tpu.memory_space<vmem>>) attributes {dimension_semantics = [#tpu.dimension_semantics<parallel>], iteration_bounds = array<i64: 1>, scalar_prefetch = 0 : i64, scratch_operands = 0 : i64, tpu.core_type = #tpu.core_type<tc>, window_params = [{transform_indices = @transform_0, window_bounds = array<i64: 128, 384>}, {pipeline_mode = #tpu.pipeline_mode<synchronous>, transform_indices = @transform_1, window_bounds = array<i64: 384, 128>}, {pipeline_mode = #tpu.pipeline_mode<synchronous>, transform_indices = @transform_2, window_bounds = array<i64: 1, 128>}, {transform_indices = @transform_3, window_bounds = array<i64: 128, 128>}]} {
    %c0 = arith.constant 0 : index
    %c0_0 = arith.constant 0 : index
    %0 = vector.load %arg1[%c0, %c0_0] : memref<128x384xf32, #tpu.memory_space<vmem>>, vector<128x384xf32>
    %c0_1 = arith.constant 0 : index
    %c0_2 = arith.constant 0 : index
    %1 = vector.load %arg2[%c0_1, %c0_2] : memref<384x128xf32, #tpu.memory_space<vmem>>, vector<384x128xf32>
    %cst = arith.constant dense<0.000000e+00> : vector<128x128xf32>
    %2 = tpu.matmul %0, %1, %cst {dimension_numbers = #tpu.dot_dimension_numbers<[1], [0], [0], [1], [0, 0, 1, 1], [], []>} : vector<128x384xf32>, vector<384x128xf32>, vector<128x128xf32> -> vector<128x128xf32>
    %c0_3 = arith.constant 0 : index
    %c0_4 = arith.constant 0 : index
    %3 = vector.load %arg3[%c0_3, %c0_4] : memref<1x128xf32, #tpu.memory_space<vmem>>, vector<1x128xf32>
    %4 = vector.broadcast %3 : vector<1x128xf32> to vector<128x128xf32>
    %5 = arith.addf %2, %4 : vector<128x128xf32>
    %cst_5 = arith.constant 0.000000e+00 : f32
    %6 = vector.broadcast %cst_5 : f32 to vector<128x128xf32>
    %7 = arith.maximumf %5, %6 : vector<128x128xf32>
    %c0_6 = arith.constant 0 : index
    %c0_7 = arith.constant 0 : index
    %8 = vector.load %arg4[%c0_6, %c0_7] : memref<128x128xf32, #tpu.memory_space<vmem>>, vector<128x128xf32>
    tpu.vector_store %arg4[%c0_6, %c0_7], %7 {strides = array<i32>} : memref<128x128xf32, #tpu.memory_space<vmem>>, vector<128x128xf32>,
    return
  }
  func.func @transform_0(%arg0: i32) -> (i32, i32) {
    %c0_i32 = arith.constant 0 : i32
    %c0_i32_0 = arith.constant 0 : i32
    return %arg0, %c0_i32 : i32, i32
  }
  func.func @transform_1(%arg0: i32) -> (i32, i32) {
    %c0_i32 = arith.constant 0 : i32
    %c0_i32_0 = arith.constant 0 : i32
    %c0_i32_1 = arith.constant 0 : i32
    return %c0_i32, %c0_i32_0 : i32, i32
  }
  func.func @transform_2(%arg0: i32) -> (i32, i32) {
    %c0_i32 = arith.constant 0 : i32
    %c0_i32_0 = arith.constant 0 : i32
    %c0_i32_1 = arith.constant 0 : i32
    return %c0_i32, %c0_i32_0 : i32, i32
  }
  func.func @transform_3(%arg0: i32) -> (i32, i32) {
    %c0_i32 = arith.constant 0 : i32
    %c0_i32_0 = arith.constant 0 : i32
    return %arg0, %c0_i32 : i32, i32
  }
}

</mosaic_0001>

<llo_original>
// kernel: stem_forward.1
$region0: #{stem_forward.1}
  #allocation0 [shape = 'u32[]', space=smem, size = 0x4, offset = 0x4, fixed_abs, tag = 'smem constant byte address 0x4 - core index']
  #allocation1 [shape = 'u32[144,128]{1,0:T(1,128)}', space=vmem, size = 0x12000, scoped, tag = 'internal scratch']
  %s0 = inlined_call_operand.vmem [shape: f32[128,384], index: 0, kind: input, shape index: {}]
  %s1 = inlined_call_operand.vmem [shape: f32[384,128], index: 1, kind: input, shape index: {}]
  %s2 = inlined_call_operand.vmem [shape: f32[1,128], index: 2, kind: input, shape index: {}]
  %s3 = inlined_call_operand.hbm [shape: f32[128,128], index: 3, kind: output, shape index: {}]
  %s4 = sld [smem:[#allocation0]]
  $region22: #{stem_forward.1} parent=0
    _
  %s6 = ssub.s32 1, %s4
  %s7 = scalar_select 0, %s6, %s4
  $region1: #{stem_forward.1} parent=0
    #allocation2 [shape = 'u8[65536]{0}', space=vmem, size = 0x10000, scoped, tag = 'output window, operand 0, single buffered']
    #allocation3 [shape = 's32[1]{0}', space=sflag, size = 0x4, scoped, tag = 'scoped memory for stem_forward.1']
    %8 = vsyncpa [#allocation3], 0
    // Predicated region
    $region2: #{stem_forward.1} parent=1 // pred_check
      _
    $region3: #{stem_forward.1} parent=1 // pred_check_branch
      %10 = sbr.rel (0) target = $region5
    $region4: #{stem_forward.1} parent=1 // pred_region
      _
    $region5: #{stem_forward.1} parent=1 // pred_fallthru
      _
    // Predicated region
    $region6: #{stem_forward.1} parent=1 // pred_check
      _
    $region7: #{stem_forward.1} parent=1 // pred_check_branch
      %12 = sbr.rel (0) target = $region9
    $region8: #{stem_forward.1} parent=1 // pred_region
      _
    $region9: #{stem_forward.1} parent=1 // pred_fallthru
      _
    // Predicated region
    $region10: #{stem_forward.1} parent=1 // pred_check
      _
    $region11: #{stem_forward.1} parent=1 // pred_check_branch
      %14 = sbr.rel (0) target = $region13
    $region12: #{stem_forward.1} parent=1 // pred_region
      _
    $region13: #{stem_forward.1} parent=1 // pred_fallthru
      _
    %v15 = vld [vmem:[%s0] sm:$0xff]
    %v16 = vld [vmem:[%s0 + $0x8] sm:$0xff]
    %v17 = vld [vmem:[%s0 + $0x10] sm:$0xff]
    %v18 = vld [vmem:[%s0 + $0x18] sm:$0xff]
    %v19 = vld [vmem:[%s0 + $0x20] sm:$0xff]
    %v20 = vld [vmem:[%s0 + $0x28] sm:$0xff]
    %v21 = vld [vmem:[%s0 + $0x30] sm:$0xff]
    %v22 = vld [vmem:[%s0 + $0x38] sm:$0xff]
    %v23 = vld [vmem:[%s0 + $0x40] sm:$0xff]
    %v24 = vld [vmem:[%s0 + $0x48] sm:$0xff]
    %v25 = vld [vmem:[%s0 + $0x50] sm:$0xff]
    %v26 = vld [vmem:[%s0 + $0x58] sm:$0xff]
    %v27 = vld [vmem:[%s0 + $0x60] sm:$0xff]
    %v28 = vld [vmem:[%s0 + $0x68] sm:$0xff]
    %v29 = vld [vmem:[%s0 + $0x70] sm:$0xff]
    %v30 = vld [vmem:[%s0 + $0x78] sm:$0xff]
    %v31 = vld [vmem:[%s0 + $0x80] sm:$0xff]
    %v32 = vld [vmem:[%s0 + $0x88] sm:$0xff]
    %v33 = vld [vmem:[%s0 + $0x90] sm:$0xff]
    %v34 = vld [vmem:[%s0 + $0x98] sm:$0xff]
    %v35 = vld [vmem:[%s0 + $0xa0] sm:$0xff]
    %v36 = vld [vmem:[%s0 + $0xa8] sm:$0xff]
    %v37 = vld [vmem:[%s0 + $0xb0] sm:$0xff]
    %v38 = vld [vmem:[%s0 + $0xb8] sm:$0xff]
    %v39 = vld [vmem:[%s0 + $0xc0] sm:$0xff]
    %v40 = vld [vmem:[%s0 + $0xc8] sm:$0xff]
    %v41 = vld [vmem:[%s0 + $0xd0] sm:$0xff]
    %v42 = vld [vmem:[%s0 + $0xd8] sm:$0xff]
    %v43 = vld [vmem:[%s0 + $0xe0] sm:$0xff]
    %v44 = vld [vmem:[%s0 + $0xe8] sm:$0xff]
    %v45 = vld [vmem:[%s0 + $0xf0] sm:$0xff]
    %v46 = vld [vmem:[%s0 + $0xf8] sm:$0xff]
    %v47 = vld [vmem:[%s0 + $0x100] sm:$0xff]
    %v48 = vld [vmem:[%s0 + $0x108] sm:$0xff]
    %v49 = vld [vmem:[%s0 + $0x110] sm:$0xff]
    %v50 = vld [vmem:[%s0 + $0x118] sm:$0xff]
    %v51 = vld [vmem:[%s0 + $0x120] sm:$0xff]
    %v52 = vld [vmem:[%s0 + $0x128] sm:$0xff]
    %v53 = vld [vmem:[%s0 + $0x130] sm:$0xff]
    %v54 = vld [vmem:[%s0 + $0x138] sm:$0xff]
    %v55 = vld [vmem:[%s0 + $0x140] sm:$0xff]
    %v56 = vld [vmem:[%s0 + $0x148] sm:$0xff]
    %v57 = vld [vmem:[%s0 + $0x150] sm:$0xff]
    %v58 = vld [vmem:[%s0 + $0x158] sm:$0xff]
    %v59 = vld [vmem:[%s0 + $0x160] sm:$0xff]
    %v60 = vld [vmem:[%s0 + $0x168] sm:$0xff]
    %v61 = vld [vmem:[%s0 + $0x170] sm:$0xff]
    %v62 = vld [vmem:[%s0 + $0x178] sm:$0xff]
    %v63 = vld [vmem:[%s1] sm:$0xff]
    %v64 = vld [vmem:[%s1 + $0x8] sm:$0xff]
    %v65 = vld [vmem:[%s1 + $0x10] sm:$0xff]
    %v66 = vld [vmem:[%s1 + $0x18] sm:$0xff]
    %v67 = vld [vmem:[%s1 + $0x20] sm:$0xff]
    %v68 = vld [vmem:[%s1 + $0x28] sm:$0xff]
    %v69 = vld [vmem:[%s1 + $0x30] sm:$0xff]
    %v70 = vld [vmem:[%s1 + $0x38] sm:$0xff]
    %v71 = vld [vmem:[%s1 + $0x40] sm:$0xff]
    %v72 = vld [vmem:[%s1 + $0x48] sm:$0xff]
    %v73 = vld [vmem:[%s1 + $0x50] sm:$0xff]
    %v74 = vld [vmem:[%s1 + $0x58] sm:$0xff]
    %v75 = vld [vmem:[%s1 + $0x60] sm:$0xff]
    %v76 = vld [vmem:[%s1 + $0x68] sm:$0xff]
    %v77 = vld [vmem:[%s1 + $0x70] sm:$0xff]
    %v78 = vld [vmem:[%s1 + $0x78] sm:$0xff]
    %v79 = vld [vmem:[%s1 + $0x80] sm:$0xff]
    %v80 = vld [vmem:[%s1 + $0x88] sm:$0xff]
    %v81 = vld [vmem:[%s1 + $0x90] sm:$0xff]
    %v82 = vld [vmem:[%s1 + $0x98] sm:$0xff]
    %v83 = vld [vmem:[%s1 + $0xa0] sm:$0xff]
    %v84 = vld [vmem:[%s1 + $0xa8] sm:$0xff]
    %v85 = vld [vmem:[%s1 + $0xb0] sm:$0xff]
    %v86 = vld [vmem:[%s1 + $0xb8] sm:$0xff]
    %v87 = vld [vmem:[%s1 + $0xc0] sm:$0xff]
    %v88 = vld [vmem:[%s1 + $0xc8] sm:$0xff]
    %v89 = vld [vmem:[%s1 + $0xd0] sm:$0xff]
    %v90 = vld [vmem:[%s1 + $0xd8] sm:$0xff]
    %v91 = vld [vmem:[%s1 + $0xe0] sm:$0xff]
    %v92 = vld [vmem:[%s1 + $0xe8] sm:$0xff]
    %v93 = vld [vmem:[%s1 + $0xf0] sm:$0xff]
    %v94 = vld [vmem:[%s1 + $0xf8] sm:$0xff]
    %v95 = vld [vmem:[%s1 + $0x100] sm:$0xff]
    %v96 = vld [vmem:[%s1 + $0x108] sm:$0xff]
    %v97 = vld [vmem:[%s1 + $0x110] sm:$0xff]
    %v98 = vld [vmem:[%s1 + $0x118] sm:$0xff]
    %v99 = vld [vmem:[%s1 + $0x120] sm:$0xff]
    %v100 = vld [vmem:[%s1 + $0x128] sm:$0xff]
    %v101 = vld [vmem:[%s1 + $0x130] sm:$0xff]
    %v102 = vld [vmem:[%s1 + $0x138] sm:$0xff]
    %v103 = vld [vmem:[%s1 + $0x140] sm:$0xff]
    %v104 = vld [vmem:[%s1 + $0x148] sm:$0xff]
    %v105 = vld [vmem:[%s1 + $0x150] sm:$0xff]
    %v106 = vld [vmem:[%s1 + $0x158] sm:$0xff]
    %v107 = vld [vmem:[%s1 + $0x160] sm:$0xff]
    %v108 = vld [vmem:[%s1 + $0x168] sm:$0xff]
    %v109 = vld [vmem:[%s1 + $0x170] sm:$0xff]
    %v110 = vld [vmem:[%s1 + $0x178] sm:$0xff]
    %v111 = vld [vmem:[%s2] sm:$0x1]
    %v113 = vlaneseq
    %v114 = vshrl.u32 %v113, 7
    %v115 = vsub.s32 0, %v114
    %v116 = vrot.slane %v111, %v115
    %118 = vmatprep.subr.mxu0 0.0
    %119 = vmatpush1.msra.mxu0 %v63
    %120 = vmatprep.subr.mxu0 0.0
    %121 = vmatpush1.msra.mxu0 %v64
    %122 = vmatprep.subr.mxu0 0.0
    %123 = vmatpush1.msra.mxu0 %v65
    %124 = vmatprep.subr.mxu0 0.0
    %125 = vmatpush1.msra.mxu0 %v66
    %126 = vmatprep.subr.mxu0 0.0
    %127 = vmatpush1.msra.mxu0 %v67
    %128 = vmatprep.subr.mxu0 0.0
    %129 = vmatpush1.msra.mxu0 %v68
    %130 = vmatprep.subr.mxu0 0.0
    %131 = vmatpush1.msra.mxu0 %v69
    %132 = vmatprep.subr.mxu0 0.0
    %133 = vmatpush1.msra.mxu0 %v70
    %134 = vmatprep.subr.mxu0 0.0
    %135 = vmatpush1.msra.mxu0 %v71
    %136 = vmatprep.subr.mxu0 0.0
    %137 = vmatpush1.msra.mxu0 %v72
    %138 = vmatprep.subr.mxu0 0.0
    %139 = vmatpush1.msra.mxu0 %v73
    %140 = vmatprep.subr.mxu0 0.0
    %141 = vmatpush1.msra.mxu0 %v74
    %142 = vmatprep.subr.mxu0 0.0
    %143 = vmatpush1.msra.mxu0 %v75
    %144 = vmatprep.subr.mxu0 0.0
    %145 = vmatpush1.msra.mxu0 %v76
    %146 = vmatprep.subr.mxu0 0.0
    %147 = vmatpush1.msra.mxu0 %v77
    %148 = vmatprep.subr.mxu0 0.0
    %149 = vmatpush1.msra.mxu0 %v78
    %150 = vmatprep.subr.mxu0 0.0
    %151 = vmatpush1.msra.mxu0 %v79
    %152 = vmatprep.subr.mxu0 0.0
    %153 = vmatpush1.msra.mxu0 %v80
    %154 = vmatprep.subr.mxu0 0.0
    %155 = vmatpush1.msra.mxu0 %v81
    %156 = vmatprep.subr.mxu0 0.0
    %157 = vmatpush1.msra.mxu0 %v82
    %158 = vmatprep.subr.mxu0 0.0
    %159 = vmatpush1.msra.mxu0 %v83
    %160 = vmatprep.subr.mxu0 0.0
    %161 = vmatpush1.msra.mxu0 %v84
    %162 = vmatprep.subr.mxu0 0.0
    %163 = vmatpush1.msra.mxu0 %v85
    %164 = vmatprep.subr.mxu0 0.0
    %165 = vmatpush1.msra.mxu0 %v86
    %166 = vmatprep.subr.mxu0 0.0
    %167 = vmatpush1.msra.mxu0 %v87
    %168 = vmatprep.subr.mxu0 0.0
    %169 = vmatpush1.msra.mxu0 %v88
    %170 = vmatprep.subr.mxu0 0.0
    %171 = vmatpush1.msra.mxu0 %v89
    %172 = vmatprep.subr.mxu0 0.0
    %173 = vmatpush1.msra.mxu0 %v90
    %174 = vmatprep.subr.mxu0 0.0
    %175 = vmatpush1.msra.mxu0 %v91
    %176 = vmatprep.subr.mxu0 0.0
    %177 = vmatpush1.msra.mxu0 %v92
    %178 = vmatprep.subr.mxu0 0.0
    %179 = vmatpush1.msra.mxu0 %v93
    %180 = vmatprep.subr.mxu0 0.0
    %181 = vmatpush1.msra.mxu0 %v94
    %182 = vmatprep.mubr.f32.mxu0 %v16
    %183 = vmatmul.mubr.f32.gmra.mrb[0].mxu0 %v15
    %v184 = vpop.f32.mrb[0].mxu0
    %v185 = vadd.f32 %v116, %v184
    %v186 = vpop.f32.mrb[0].mxu0
    %187 = vmatprep.mubr.f32.mxu0 %v19
    %188 = vmatmul.mubr.f32.gmra.mrb[0].mxu0 %v18
    %v189 = vpop.f32.mrb[0].mxu0
    %v190 = vadd.f32 %v116, %v189
    %v191 = vpop.f32.mrb[0].mxu0
    %192 = vmatprep.mubr.f32.mxu0 %v22
    %193 = vmatmul.mubr.f32.gmra.mrb[0].mxu0 %v21
    %v194 = vpop.f32.mrb[0].mxu0
    %v195 = vadd.f32 %v116, %v194
    %v196 = vpop.f32.mrb[0].mxu0
    %197 = vmatprep.mubr.f32.mxu0 %v25
    %198 = vmatmul.mubr.f32.gmra.mrb[0].mxu0 %v24
    %v199 = vpop.f32.mrb[0].mxu0
    %v200 = vadd.f32 %v116, %v199
    %v201 = vpop.f32.mrb[0].mxu0
    %202 = vmatprep.mubr.f32.mxu0 %v28
    %203 = vmatmul.mubr.f32.gmra.mrb[0].mxu0 %v27
    %v204 = vpop.f32.mrb[0].mxu0
    %v205 = vadd.f32 %v116, %v204
    %v206 = vpop.f32.mrb[0].mxu0
    %207 = vmatprep.mubr.f32.mxu0 %v31
    %208 = vmatmul.mubr.f32.gmra.mrb[0].mxu0 %v30
    %v209 = vpop.f32.mrb[0].mxu0
    %v210 = vadd.f32 %v116, %v209
    %v211 = vpop.f32.mrb[0].mxu0
    %212 = vmatprep.mubr.f32.mxu0 %v34
    %213 = vmatmul.mubr.f32.gmra.mrb[0].mxu0 %v33
    %v214 = vpop.f32.mrb[0].mxu0
    %v215 = vadd.f32 %v116, %v214
    %v216 = vpop.f32.mrb[0].mxu0
    %217 = vmatprep.mubr.f32.mxu0 %v37
    %218 = vmatmul.mubr.f32.gmra.mrb[0].mxu0 %v36
    %v219 = vpop.f32.mrb[0].mxu0
    %v220 = vadd.f32 %v116, %v219
    %v221 = vpop.f32.mrb[0].mxu0
    %222 = vmatprep.mubr.f32.mxu0 %v40
    %223 = vmatmul.mubr.f32.gmra.mrb[0].mxu0 %v39
    %v224 = vpop.f32.mrb[0].mxu0
    %v225 = vadd.f32 %v116, %v224
    %v226 = vpop.f32.mrb[0].mxu0
    %227 = vmatprep.mubr.f32.mxu0 %v43
    %228 = vmatmul.mubr.f32.gmra.mrb[0].mxu0 %v42
    %v229 = vpop.f32.mrb[0].mxu0
    %v230 = vadd.f32 %v116, %v229
    %v231 = vpop.f32.mrb[0].mxu0
    %232 = vmatprep.mubr.f32.mxu0 %v46
    %233 = vmatmul.mubr.f32.gmra.mrb[0].mxu0 %v45
    %v234 = vpop.f32.mrb[0].mxu0
    %v235 = vadd.f32 %v116, %v234
    %v236 = vpop.f32.mrb[0].mxu0
    %237 = vmatprep.mubr.f32.mxu0 %v49
    %238 = vmatmul.mubr.f32.gmra.mrb[0].mxu0 %v48
    %v239 = vpop.f32.mrb[0].mxu0
    %v240 = vadd.f32 %v116, %v239
    %v241 = vpop.f32.mrb[0].mxu0
    %242 = vmatprep.mubr.f32.mxu0 %v52
    %243 = vmatmul.mubr.f32.gmra.mrb[0].mxu0 %v51
    %v244 = vpop.f32.mrb[0].mxu0
    %v245 = vadd.f32 %v116, %v244
    %v246 = vpop.f32.mrb[0].mxu0
    %247 = vmatprep.mubr.f32.mxu0 %v55
    %248 = vmatmul.mubr.f32.gmra.mrb[0].mxu0 %v54
    %v249 = vpop.f32.mrb[0].mxu0
    %v250 = vadd.f32 %v116, %v249
    %v251 = vpop.f32.mrb[0].mxu0
    %252 = vmatprep.mubr.f32.mxu0 %v58
    %253 = vmatmul.mubr.f32.gmra.mrb[0].mxu0 %v57
    %v254 = vpop.f32.mrb[0].mxu0
    %v255 = vadd.f32 %v116, %v254
    %v256 = vpop.f32.mrb[0].mxu0
    %257 = vmatprep.mubr.f32.mxu0 %v61
    %258 = vmatmul.mubr.f32.gmra.mrb[0].mxu0 %v60
    %v259 = vpop.f32.mrb[0].mxu0
    %v260 = vadd.f32 %v116, %v259
    %v261 = vpop.f32.mrb[0].mxu0
    %262 = vdwg.mxu0
    %263 = vmatprep.subr.mxu0 0.0
    %264 = vmatpush1.msra.mxu0 %v95
    %265 = vmatprep.subr.mxu0 0.0
    %266 = vmatpush1.msra.mxu0 %v96
    %267 = vmatprep.subr.mxu0 0.0
    %268 = vmatpush1.msra.mxu0 %v97
    %269 = vmatprep.subr.mxu0 0.0
    %270 = vmatpush1.msra.mxu0 %v98
    %271 = vmatprep.subr.mxu0 0.0
    %272 = vmatpush1.msra.mxu0 %v99
    %273 = vmatprep.subr.mxu0 0.0
    %274 = vmatpush1.msra.mxu0 %v100
    %275 = vmatprep.subr.mxu0 0.0
    %276 = vmatpush1.msra.mxu0 %v101
    %277 = vmatprep.subr.mxu0 0.0
    %278 = vmatpush1.msra.mxu0 %v102
    %279 = vmatprep.subr.mxu0 0.0
    %280 = vmatpush1.msra.mxu0 %v103
    %281 = vmatprep.subr.mxu0 0.0
    %282 = vmatpush1.msra.mxu0 %v104
    %283 = vmatprep.subr.mxu0 0.0
    %284 = vmatpush1.msra.mxu0 %v105
    %285 = vmatprep.subr.mxu0 0.0
    %286 = vmatpush1.msra.mxu0 %v106
    %287 = vmatprep.subr.mxu0 0.0
    %288 = vmatpush1.msra.mxu0 %v107
    %289 = vmatprep.subr.mxu0 0.0
    %290 = vmatpush1.msra.mxu0 %v108
    %291 = vmatprep.subr.mxu0 0.0
    %292 = vmatpush1.msra.mxu0 %v109
    %293 = vmatprep.subr.mxu0 0.0
    %294 = vmatpush1.msra.mxu0 %v110
    %295 = vmatprep.subr.mxu0 0.0
    %296 = vmatpush1.msra.mxu0 0.0
    %297 = vmatprep.subr.mxu0 0.0
    %298 = vmatpush1.msra.mxu0 0.0
    %299 = vmatprep.subr.mxu0 0.0
    %300 = vmatpush1.msra.mxu0 0.0
    %301 = vmatprep.subr.mxu0 0.0
    %302 = vmatpush1.msra.mxu0 0.0
    %303 = vmatprep.subr.mxu0 0.0
    %304 = vmatpush1.msra.mxu0 0.0
    %305 = vmatprep.subr.mxu0 0.0
    %306 = vmatpush1.msra.mxu0 0.0
    %307 = vmatprep.subr.mxu0 0.0
    %308 = vmatpush1.msra.mxu0 0.0
    %309 = vmatprep.subr.mxu0 0.0
    %310 = vmatpush1.msra.mxu0 0.0
    %311 = vmatprep.subr.mxu0 0.0
    %312 = vmatpush1.msra.mxu0 0.0
    %313 = vmatprep.subr.mxu0 0.0
    %314 = vmatpush1.msra.mxu0 0.0
    %315 = vmatprep.subr.mxu0 0.0
    %316 = vmatpush1.msra.mxu0 0.0
    %317 = vmatprep.subr.mxu0 0.0
    %318 = vmatpush1.msra.mxu0 0.0
    %319 = vmatprep.subr.mxu0 0.0
    %320 = vmatpush1.msra.mxu0 0.0
    %321 = vmatprep.subr.mxu0 0.0
    %322 = vmatpush1.msra.mxu0 0.0
    %323 = vmatprep.subr.mxu0 0.0
    %324 = vmatpush1.msra.mxu0 0.0
    %325 = vmatprep.subr.mxu0 0.0
    %326 = vmatpush1.msra.mxu0 0.0
    %327 = vmatprep.mubr.f32.mxu0 0.0
    %328 = vmatmul.mubr.f32.gmra.mrb[0].mxu0 %v17
    %v329 = vpop.f32.mrb[0].mxu0
    %v330 = vadd.f32 %v185, %v329
    %v331 = vpop.f32.mrb[0].mxu0
    %332 = vmatprep.mubr.f32.mxu0 0.0
    %333 = vmatmul.mubr.f32.gmra.mrb[0].mxu0 %v20
    %v334 = vpop.f32.mrb[0].mxu0
    %v335 = vadd.f32 %v190, %v334
    %v336 = vpop.f32.mrb[0].mxu0
    %337 = vmatprep.mubr.f32.mxu0 0.0
    %338 = vmatmul.mubr.f32.gmra.mrb[0].mxu0 %v23
    %v339 = vpop.f32.mrb[0].mxu0
    %v340 = vadd.f32 %v195, %v339
    %v341 = vpop.f32.mrb[0].mxu0
    %342 = vmatprep.mubr.f32.mxu0 0.0
    %343 = vmatmul.mubr.f32.gmra.mrb[0].mxu0 %v26
    %v344 = vpop.f32.mrb[0].mxu0
    %v345 = vadd.f32 %v200, %v344
    %v346 = vpop.f32.mrb[0].mxu0
    %347 = vmatprep.mubr.f32.mxu0 0.0
    %348 = vmatmul.mubr.f32.gmra.mrb[0].mxu0 %v29
    %v349 = vpop.f32.mrb[0].mxu0
    %v350 = vadd.f32 %v205, %v349
    %v351 = vpop.f32.mrb[0].mxu0
    %352 = vmatprep.mubr.f32.mxu0 0.0
    %353 = vmatmul.mubr.f32.gmra.mrb[0].mxu0 %v32
    %v354 = vpop.f32.mrb[0].mxu0
    %v355 = vadd.f32 %v210, %v354
    %v356 = vpop.f32.mrb[0].mxu0
    %357 = vmatprep.mubr.f32.mxu0 0.0
    %358 = vmatmul.mubr.f32.gmra.mrb[0].mxu0 %v35
    %v359 = vpop.f32.mrb[0].mxu0
    %v360 = vadd.f32 %v215, %v359
    %v361 = vpop.f32.mrb[0].mxu0
    %362 = vmatprep.mubr.f32.mxu0 0.0
    %363 = vmatmul.mubr.f32.gmra.mrb[0].mxu0 %v38
    %v364 = vpop.f32.mrb[0].mxu0
    %v365 = vadd.f32 %v220, %v364
    %v366 = vpop.f32.mrb[0].mxu0
    %367 = vmatprep.mubr.f32.mxu0 0.0
    %368 = vmatmul.mubr.f32.gmra.mrb[0].mxu0 %v41
    %v369 = vpop.f32.mrb[0].mxu0
    %v370 = vadd.f32 %v225, %v369
    %v371 = vpop.f32.mrb[0].mxu0
    %372 = vmatprep.mubr.f32.mxu0 0.0
    %373 = vmatmul.mubr.f32.gmra.mrb[0].mxu0 %v44
    %v374 = vpop.f32.mrb[0].mxu0
    %v375 = vadd.f32 %v230, %v374
    %v376 = vpop.f32.mrb[0].mxu0
    %377 = vmatprep.mubr.f32.mxu0 0.0
    %378 = vmatmul.mubr.f32.gmra.mrb[0].mxu0 %v47
    %v379 = vpop.f32.mrb[0].mxu0
    %v380 = vadd.f32 %v235, %v379
    %v381 = vpop.f32.mrb[0].mxu0
    %382 = vmatprep.mubr.f32.mxu0 0.0
    %383 = vmatmul.mubr.f32.gmra.mrb[0].mxu0 %v50
    %v384 = vpop.f32.mrb[0].mxu0
    %v385 = vadd.f32 %v240, %v384
    %v386 = vpop.f32.mrb[0].mxu0
    %387 = vmatprep.mubr.f32.mxu0 0.0
    %388 = vmatmul.mubr.f32.gmra.mrb[0].mxu0 %v53
    %v389 = vpop.f32.mrb[0].mxu0
    %v390 = vadd.f32 %v245, %v389
    %v391 = vpop.f32.mrb[0].mxu0
    %392 = vmatprep.mubr.f32.mxu0 0.0
    %393 = vmatmul.mubr.f32.gmra.mrb[0].mxu0 %v56
    %v394 = vpop.f32.mrb[0].mxu0
    %v395 = vadd.f32 %v250, %v394
    %v396 = vpop.f32.mrb[0].mxu0
    %397 = vmatprep.mubr.f32.mxu0 0.0
    %398 = vmatmul.mubr.f32.gmra.mrb[0].mxu0 %v59
    %v399 = vpop.f32.mrb[0].mxu0
    %v400 = vadd.f32 %v255, %v399
    %v401 = vpop.f32.mrb[0].mxu0
    %402 = vmatprep.mubr.f32.mxu0 0.0
    %403 = vmatmul.mubr.f32.gmra.mrb[0].mxu0 %v62
    %v404 = vpop.f32.mrb[0].mxu0
    %v405 = vadd.f32 %v260, %v404
    %v406 = vpop.f32.mrb[0].mxu0
    %407 = vdwg.mxu0
    %v408 = vmax.f32 %v330, 0.0
    %v409 = vmax.f32 %v335, 0.0
    %v410 = vmax.f32 %v340, 0.0
    %v411 = vmax.f32 %v345, 0.0
    %v412 = vmax.f32 %v350, 0.0
    %v413 = vmax.f32 %v355, 0.0
    %v414 = vmax.f32 %v360, 0.0
    %v415 = vmax.f32 %v365, 0.0
    %v416 = vmax.f32 %v370, 0.0
    %v417 = vmax.f32 %v375, 0.0
    %v418 = vmax.f32 %v380, 0.0
    %v419 = vmax.f32 %v385, 0.0
    %v420 = vmax.f32 %v390, 0.0
    %v421 = vmax.f32 %v395, 0.0
    %v422 = vmax.f32 %v400, 0.0
    %v423 = vmax.f32 %v405, 0.0
    %424 = vst [vmem:[#allocation2] sm:$0xff] %v408
    %425 = vst [vmem:[#allocation2 + $0x8] sm:$0xff] %v409
    %426 = vst [vmem:[#allocation2 + $0x10] sm:$0xff] %v410
    %427 = vst [vmem:[#allocation2 + $0x18] sm:$0xff] %v411
    %428 = vst [vmem:[#allocation2 + $0x20] sm:$0xff] %v412
    %429 = vst [vmem:[#allocation2 + $0x28] sm:$0xff] %v413
    %430 = vst [vmem:[#allocation2 + $0x30] sm:$0xff] %v414
    %431 = vst [vmem:[#allocation2 + $0x38] sm:$0xff] %v415
    %432 = vst [vmem:[#allocation2 + $0x40] sm:$0xff] %v416
    %433 = vst [vmem:[#allocation2 + $0x48] sm:$0xff] %v417
    %434 = vst [vmem:[#allocation2 + $0x50] sm:$0xff] %v418
    %435 = vst [vmem:[#allocation2 + $0x58] sm:$0xff] %v419
    %436 = vst [vmem:[#allocation2 + $0x60] sm:$0xff] %v420
    %437 = vst [vmem:[#allocation2 + $0x68] sm:$0xff] %v421
    %438 = vst [vmem:[#allocation2 + $0x70] sm:$0xff] %v422
    %439 = vst [vmem:[#allocation2 + $0x78] sm:$0xff] %v423
    // Predicated region
    $region14: #{stem_forward.1} parent=1 // pred_check
      _
    $region15: #{stem_forward.1} parent=1 // pred_check_branch
      %441 = sbr.rel (0) target = $region17
    $region16: #{stem_forward.1} parent=1 // pred_region
      %s443 = ssub.s32 2048, 2048
      %444 = vsyncadd [#allocation3], %s443
      %s445 = sshll.u32 [#allocation2], 4
      %s446 = int_to_ptr.vmem [resolvable:$true] %s445
      %451 = dma.vmem_to_hbm [thread:$0]  %s446, 2048, %s3, [#allocation3], 128, 128, 8
    $region17: #{stem_forward.1} parent=1 // pred_fallthru
      _
    // Predicated region
    $region18: #{stem_forward.1} parent=1 // pred_check
      _
    $region19: #{stem_forward.1} parent=1 // pred_check_branch
      %453 = sbr.rel (0) target = $region21
    $region20: #{stem_forward.1} parent=1 // pred_region
      %454 = dma.done [#allocation3], 2048
    $region21: #{stem_forward.1} parent=1 // pred_fallthru
      _
    %455 = vsyncpa [#allocation3], 1

</llo_original>
